<compile_context>
chip_gen: v5e
topology: v5e:2x2
jax: 0.10.0
libtpu: 0.0.40
codegen_flags: <defaults>
</compile_context>

<pallas_src>
import functools

import jax
import jax.numpy as jnp
from jax.experimental import pallas as pl
from jax.experimental.pallas import tpu as pltpu


def _softplus(x):
    # torch.nn.Softplus(beta=1, threshold=20). exp() overflow only occurs in the branch that
    # the where() discards (inf, never NaN), so no extra clamp is needed.
    return jnp.where(x > 20.0, x, jnp.log1p(jnp.exp(x)))


def _round_up(x, m):
    return (x + m - 1) // m * m


# --------------------------------- fused kernel ----------------------------------------------


def _make_fused_kernel(layer_meta):
    """layer_meta: tuple of (row_offset, d_in, d_out) static ints per fused layer."""

    def kernel(t_ref, y_ref, p_ref, out_ref):
        t = t_ref[0, 0]
        h = y_ref[...]
        for off, d_in, d_out in layer_meta:          # static Python unroll
            w = p_ref[off:off + d_in, :d_out]                     # [d_in, d_out] block-diag W
            tb = p_ref[off + d_in:off + d_in + 2, :d_out]         # [2, d_out]: (w_t ; b)
            bias = t * tb[0:1, :] + tb[1:2, :]                    # [1, d_out] effective bias
            h = jnp.dot(h, w, preferred_element_type=jnp.float32) + bias
            h = _softplus(h)
        out_ref[...] = h                                          # already [dx | aug]

    return kernel


# --------------------------------- parameter packing -----------------------------------------


def pack_aug_odenet_params(main_params, aug_params, effective_dim):
    """Fuse main/aug layers into block-diagonal weights and pack everything into one
    lane-padded f32 array.

    main_params / aug_params: list of (WxT [d_in,d_out], w_t [1,d_out], b [1,d_out]).
    Returns (packed [R, DPAD] f32, layer_meta tuple of (row_offset, d_in, d_out)).
    """
    assert len(main_params) == len(aug_params), (
        "block-diagonal fusion requires aug_hidden_dims == hidden_dims (the module default)")

    d_outs = [m[0].shape[1] + a[0].shape[1] for m, a in zip(main_params, aug_params)]
    dpad = _round_up(max(d_outs), 128)

    blocks, layer_meta, off = [], [], 0
    for l, ((wm, wtm, bm), (wa, wta, ba)) in enumerate(zip(main_params, aug_params)):
        dm_in, dm_out = wm.shape
        da_in, da_out = wa.shape
        d_out = dm_out + da_out
        if l == 0:
            # First fused layer consumes y directly: the aug weight block starts at row
            # `effective_dim`, so the zero rows above it implement y[:, effective_dim:] free.
            d_in = dm_in  # == in_dim
            w = jnp.zeros((d_in, d_out), jnp.float32)
            w = w.at[:, :dm_out].set(wm)
            w = w.at[effective_dim:, dm_out:].set(wa)
        else:
            d_in = dm_in + da_in
            w = jnp.zeros((d_in, d_out), jnp.float32)
            w = w.at[:dm_in, :dm_out].set(wm)
            w = w.at[dm_in:, dm_out:].set(wa)
        wt = jnp.concatenate([wtm, wta], axis=1)[0]   # [d_out]
        b = jnp.concatenate([bm, ba], axis=1)[0]      # [d_out]

        n_rows = _round_up(d_in + 2, 8)               # keep every block sublane-aligned
        blk = jnp.zeros((n_rows, dpad), jnp.float32)
        blk = blk.at[:d_in, :d_out].set(w)
        blk = blk.at[d_in, :d_out].set(wt)
        blk = blk.at[d_in + 1, :d_out].set(b)

        blocks.append(blk)
        layer_meta.append((off, d_in, d_out))
        off += n_rows

    return jnp.concatenate(blocks, axis=0), tuple(layer_meta)


# --------------------------------- forward wrapper -------------------------------------------


@functools.partial(jax.jit, static_argnames=("layer_meta",))
def _aug_odenet_pallas(t_arr, y, packed, *, layer_meta):
    B = y.shape[0]
    out_dim = layer_meta[-1][2]
    kernel = _make_fused_kernel(layer_meta)
    return pl.pallas_call(
        kernel,
        out_shape=jax.ShapeDtypeStruct((B, out_dim), jnp.float32),
        in_specs=[
            pl.BlockSpec(memory_space=pltpu.MemorySpace.SMEM),   # scalar t
            pl.BlockSpec(memory_space=pltpu.MemorySpace.VMEM),   # y
            pl.BlockSpec(memory_space=pltpu.MemorySpace.VMEM),   # packed fused params
        ],
        out_specs=pl.BlockSpec(memory_space=pltpu.MemorySpace.VMEM),
    )(t_arr, y, packed)


def aug_odenet_forward(t, y, packed, layer_meta):
    t_arr = jnp.asarray(t, jnp.float32).reshape(1, 1)
    return _aug_odenet_pallas(t_arr, y, packed, layer_meta=layer_meta)


# ---------------- parameter construction (deterministic, PyTorch-Linear-style init) ----------


def _init_concat_linear(key, d_in, d_out):
    """nn.Linear(d_in + 1, d_out) with uniform(-k, k) bounds; split into (WxT, w_t, b)."""
    k = 1.0 / jnp.sqrt(jnp.float32(d_in + 1))
    kw, kb = jax.random.split(key)
    w = jax.random.uniform(kw, (d_out, d_in + 1), jnp.float32, -k, k)  # [out, in+1]
    b = jax.random.uniform(kb, (d_out,), jnp.float32, -k, k)
    wt = w[:, :1].T            # t column  -> [1, d_out]
    wxT = w[:, 1:].T           # x weights -> [d_in, d_out]
    return (wxT, wt, b.reshape(1, d_out))


def build_aug_odenet_params(key, in_dim, effective_dim, hidden_dims):
    hidden_dims = [hidden_dims] if isinstance(hidden_dims, int) else list(hidden_dims)
    # Main path: super().__init__ is called with out_dim=effective_dim.
    main_dims = [in_dim] + hidden_dims + [effective_dim]
    # Aug path: aug_hidden_dims defaults to a copy of hidden_dims.
    aug_in = in_dim - effective_dim
    aug_dims = [aug_in] + hidden_dims + [aug_in]

    main_params, aug_params = [], []
    for i in range(len(main_dims) - 1):
        key, sub = jax.random.split(key)
        main_params.append(_init_concat_linear(sub, main_dims[i], main_dims[i + 1]))
    for i in range(len(aug_dims) - 1):
        key, sub = jax.random.split(key)
        aug_params.append(_init_concat_linear(sub, aug_dims[i], aug_dims[i + 1]))
    return main_params, aug_params


# ---------------- pure-JAX reference for verification ----------------------------------------


def ref_forward(t, y, main_params, aug_params, effective_dim):
    dx = y
    for wxT, wt, b in main_params:
        dx = _softplus(jnp.dot(dx, wxT) + t * wt + b)
    aug = y[:, effective_dim:]
    for wxT, wt, b in aug_params:
        aug = _softplus(jnp.dot(aug, wxT) + t * wt + b)
    return jnp.concatenate([dx, aug], axis=1)


if __name__ == "__main__":
    key = jax.random.PRNGKey(0)

    B = 8
    in_dim = 10          # data features + augment features
    effective_dim = 6    # data features
    hidden_dims = [32, 32]
    t = 0.5

    kp, ky = jax.random.split(key)
    main_params, aug_params = build_aug_odenet_params(kp, in_dim, effective_dim, hidden_dims)
    y = jax.random.normal(ky, (B, in_dim), jnp.float32)

    packed, layer_meta = pack_aug_odenet_params(main_params, aug_params, effective_dim)

    out = aug_odenet_forward(t, y, packed, layer_meta)
    out = jax.block_until_ready(out)

    expected = ref_forward(jnp.float32(t), y, main_params, aug_params, effective_dim)
    assert out.shape == (B, in_dim), out.shape
    max_err = float(jnp.max(jnp.abs(out - expected)))
    assert jnp.allclose(out, expected, atol=1e-5, rtol=1e-5), max_err

    print("KERNEL_OK")
</pallas_src>

<mosaic_0001>
module attributes {stable_mosaic.version = 11 : i64} {
  func.func @kernel(%arg0: memref<1x1xf32, #tpu.memory_space<smem>>, %arg1: memref<8x10xf32, #tpu.memory_space<vmem>>, %arg2: memref<160x128xf32, #tpu.memory_space<vmem>>, %arg3: memref<8x10xf32, #tpu.memory_space<vmem>>) attributes {dimension_semantics = [], scalar_prefetch = 0 : i64, scratch_operands = 0 : i64, tpu.core_type = #tpu.core_type<tc>} {
    %c0 = arith.constant 0 : index
    %c0_0 = arith.constant 0 : index
    %0 = memref.load %arg0[%c0, %c0_0] : memref<1x1xf32, #tpu.memory_space<smem>>
    %c0_1 = arith.constant 0 : index
    %c0_2 = arith.constant 0 : index
    %1 = vector.load %arg1[%c0_1, %c0_2] : memref<8x10xf32, #tpu.memory_space<vmem>>, vector<8x10xf32>
    %c0_3 = arith.constant 0 : index
    %c0_4 = arith.constant 0 : index
    %2 = vector.load %arg2[%c0_3, %c0_4] : memref<160x128xf32, #tpu.memory_space<vmem>>, vector<10x64xf32>
    %c10 = arith.constant 10 : index
    %c0_5 = arith.constant 0 : index
    %3 = vector.load %arg2[%c10, %c0_5] : memref<160x128xf32, #tpu.memory_space<vmem>>, vector<2x64xf32>
    %4 = vector.extract_strided_slice %3 {offsets = [0, 0], sizes = [1, 64], strides = [1, 1]} : vector<2x64xf32> to vector<1x64xf32>
    %5 = vector.broadcast %0 : f32 to vector<1x64xf32>
    %6 = arith.mulf %5, %4 : vector<1x64xf32>
    %7 = vector.extract_strided_slice %3 {offsets = [1, 0], sizes = [1, 64], strides = [1, 1]} : vector<2x64xf32> to vector<1x64xf32>
    %8 = arith.addf %6, %7 : vector<1x64xf32>
    %cst = arith.constant dense<0.000000e+00> : vector<8x64xf32>
    %9 = tpu.matmul %1, %2, %cst {dimension_numbers = #tpu.dot_dimension_numbers<[1], [0], [0], [1], [0, 0, 1, 1], [], []>} : vector<8x10xf32>, vector<10x64xf32>, vector<8x64xf32> -> vector<8x64xf32>
    %10 = vector.broadcast %8 : vector<1x64xf32> to vector<8x64xf32>
    %11 = arith.addf %9, %10 : vector<8x64xf32>
    %cst_6 = arith.constant 2.000000e+01 : f32
    %12 = vector.broadcast %cst_6 : f32 to vector<8x64xf32>
    %13 = arith.cmpf ogt, %11, %12 : vector<8x64xf32>
    %14 = math.exp %11 : vector<8x64xf32>
    %15 = math.log1p %14 : vector<8x64xf32>
    %16 = arith.select %13, %11, %15 : vector<8x64xi1>, vector<8x64xf32>
    %c16 = arith.constant 16 : index
    %c0_7 = arith.constant 0 : index
    %17 = vector.load %arg2[%c16, %c0_7] : memref<160x128xf32, #tpu.memory_space<vmem>>, vector<64x64xf32>
    %c80 = arith.constant 80 : index
    %c0_8 = arith.constant 0 : index
    %18 = vector.load %arg2[%c80, %c0_8] : memref<160x128xf32, #tpu.memory_space<vmem>>, vector<2x64xf32>
    %19 = vector.extract_strided_slice %18 {offsets = [0, 0], sizes = [1, 64], strides = [1, 1]} : vector<2x64xf32> to vector<1x64xf32>
    %20 = vector.broadcast %0 : f32 to vector<1x64xf32>
    %21 = arith.mulf %20, %19 : vector<1x64xf32>
    %22 = vector.extract_strided_slice %18 {offsets = [1, 0], sizes = [1, 64], strides = [1, 1]} : vector<2x64xf32> to vector<1x64xf32>
    %23 = arith.addf %21, %22 : vector<1x64xf32>
    %cst_9 = arith.constant dense<0.000000e+00> : vector<8x64xf32>
    %24 = tpu.matmul %16, %17, %cst_9 {dimension_numbers = #tpu.dot_dimension_numbers<[1], [0], [0], [1], [0, 0, 1, 1], [], []>} : vector<8x64xf32>, vector<64x64xf32>, vector<8x64xf32> -> vector<8x64xf32>
    %25 = vector.broadcast %23 : vector<1x64xf32> to vector<8x64xf32>
    %26 = arith.addf %24, %25 : vector<8x64xf32>
    %cst_10 = arith.constant 2.000000e+01 : f32
    %27 = vector.broadcast %cst_10 : f32 to vector<8x64xf32>
    %28 = arith.cmpf ogt, %26, %27 : vector<8x64xf32>
    %29 = math.exp %26 : vector<8x64xf32>
    %30 = math.log1p %29 : vector<8x64xf32>
    %31 = arith.select %28, %26, %30 : vector<8x64xi1>, vector<8x64xf32>
    %c88 = arith.constant 88 : index
    %c0_11 = arith.constant 0 : index
    %32 = vector.load %arg2[%c88, %c0_11] : memref<160x128xf32, #tpu.memory_space<vmem>>, vector<64x10xf32>
    %c152 = arith.constant 152 : index
    %c0_12 = arith.constant 0 : index
    %33 = vector.load %arg2[%c152, %c0_12] : memref<160x128xf32, #tpu.memory_space<vmem>>, vector<2x10xf32>
    %34 = vector.extract_strided_slice %33 {offsets = [0, 0], sizes = [1, 10], strides = [1, 1]} : vector<2x10xf32> to vector<1x10xf32>
    %35 = vector.broadcast %0 : f32 to vector<1x10xf32>
    %36 = arith.mulf %35, %34 : vector<1x10xf32>
    %37 = vector.extract_strided_slice %33 {offsets = [1, 0], sizes = [1, 10], strides = [1, 1]} : vector<2x10xf32> to vector<1x10xf32>
    %38 = arith.addf %36, %37 : vector<1x10xf32>
    %cst_13 = arith.constant dense<0.000000e+00> : vector<8x10xf32>
    %39 = tpu.matmul %31, %32, %cst_13 {dimension_numbers = #tpu.dot_dimension_numbers<[1], [0], [0], [1], [0, 0, 1, 1], [], []>} : vector<8x64xf32>, vector<64x10xf32>, vector<8x10xf32> -> vector<8x10xf32>
    %40 = vector.broadcast %38 : vector<1x10xf32> to vector<8x10xf32>
    %41 = arith.addf %39, %40 : vector<8x10xf32>
    %cst_14 = arith.constant 2.000000e+01 : f32
    %42 = vector.broadcast %cst_14 : f32 to vector<8x10xf32>
    %43 = arith.cmpf ogt, %41, %42 : vector<8x10xf32>
    %44 = math.exp %41 : vector<8x10xf32>
    %45 = math.log1p %44 : vector<8x10xf32>
    %46 = arith.select %43, %41, %45 : vector<8x10xi1>, vector<8x10xf32>
    %c0_15 = arith.constant 0 : index
    %c0_16 = arith.constant 0 : index
    %47 = vector.load %arg3[%c0_15, %c0_16] : memref<8x10xf32, #tpu.memory_space<vmem>>, vector<8x10xf32>
    tpu.vector_store %arg3[%c0_15, %c0_16], %46 {strides = array<i32>} : memref<8x10xf32, #tpu.memory_space<vmem>>, vector<8x10xf32>,
    return
  }
}

</mosaic_0001>

<llo_original>
// kernel: _aug_odenet_pallas.1
$region0: #{_aug_odenet_pallas.1}
  #allocation0 [shape = 'u32[]', space=smem, size = 0x4, offset = 0x4, fixed_abs, tag = 'smem constant byte address 0x4 - core index']
  #allocation1 [shape = 'u32[72,128]{1,0:T(1,128)}', space=vmem, size = 0x9000, scoped, tag = 'internal scratch']
  #allocation2 [shape = 'f32[1,1]{1,0:T(1,128)S(6)}', space=smem, size = 0x200, scoped, tag = 'scoped memory for _aug_odenet_pallas.1']
  %s0 = inlined_call_operand.<no memory space> [shape: f32[1,1], index: 0, kind: input, shape index: {}]
  %s1 = inlined_call_operand.hbm [shape: f32[8,10], index: 1, kind: input, shape index: {}]
  %s2 = inlined_call_operand.hbm [shape: f32[160,128], index: 2, kind: input, shape index: {}]
  %s3 = inlined_call_operand.hbm [shape: f32[8,10], index: 3, kind: output, shape index: {}]
  %s4 = sld [smem:[#allocation0]]
  $region30: #{_aug_odenet_pallas.1} parent=0
    _
  %s6 = ssub.s32 1, %s4
  %s7 = scalar_select 0, %s6, %s4
  %8 = sst [smem:[#allocation2]] %s0
  $region1: #{_aug_odenet_pallas.1} parent=0
    #allocation3 [shape = 'u8[4096]{0}', space=vmem, size = 0x1000, scoped, tag = 'input window, operand 1, single buffered']
    #allocation4 [shape = 's32[1]{0}', space=sflag, size = 0x4, scoped, tag = 'scoped memory for _aug_odenet_pallas.1']
    #allocation5 [shape = 's32[1]{0}', space=sflag, size = 0x4, scoped, tag = 'scoped memory for _aug_odenet_pallas.1']
    #allocation6 [shape = 'u8[81920]{0}', space=vmem, size = 0x14000, scoped, tag = 'input window, operand 2, single buffered']
    #allocation7 [shape = 's32[1]{0}', space=sflag, size = 0x4, scoped, tag = 'scoped memory for _aug_odenet_pallas.1']
    #allocation8 [shape = 'u8[4096]{0}', space=vmem, size = 0x1000, scoped, tag = 'output window, operand 0, single buffered']
    %9 = vsyncpa [#allocation4], 0
    %10 = vsyncpa [#allocation7], 0
    %11 = vsyncpa [#allocation5], 0
    // Predicated region
    $region2: #{_aug_odenet_pallas.1} parent=1 // pred_check
      _
    $region3: #{_aug_odenet_pallas.1} parent=1 // pred_check_branch
      %13 = sbr.rel (0) target = $region5
    $region4: #{_aug_odenet_pallas.1} parent=1 // pred_region
      _
    $region5: #{_aug_odenet_pallas.1} parent=1 // pred_fallthru
      _
    // Predicated region
    $region6: #{_aug_odenet_pallas.1} parent=1 // pred_check
      _
    $region7: #{_aug_odenet_pallas.1} parent=1 // pred_check_branch
      %15 = sbr.rel (0) target = $region9
    $region8: #{_aug_odenet_pallas.1} parent=1 // pred_region
      %17 = vsyncadd [#allocation4], 0
      %s19 = sshll.u32 %s1, 4
      %s20 = int_to_ptr.hbm [resolvable:$true] %s19
      %s21 = sshll.u32 [#allocation3], 4
      %s22 = int_to_ptr.vmem [resolvable:$true] %s21
      %24 = dma.hbm_to_vmem [thread:$0]  %s20, 128, %s22, [#allocation4]
    $region9: #{_aug_odenet_pallas.1} parent=1 // pred_fallthru
      _
    // Predicated region
    $region10: #{_aug_odenet_pallas.1} parent=1 // pred_check
      _
    $region11: #{_aug_odenet_pallas.1} parent=1 // pred_check_branch
      %26 = sbr.rel (0) target = $region13
    $region12: #{_aug_odenet_pallas.1} parent=1 // pred_region
      %28 = vsyncadd [#allocation7], 0
      %s29 = sshll.u32 %s2, 4
      %s30 = int_to_ptr.hbm [resolvable:$true] %s29
      %s31 = sshll.u32 [#allocation6], 4
      %s32 = int_to_ptr.vmem [resolvable:$true] %s31
      %37 = dma.hbm_to_vmem [thread:$0]  %s30, 2560, %s32, [#allocation7], 128, 128, 8
    $region13: #{_aug_odenet_pallas.1} parent=1 // pred_fallthru
      _
    // Predicated region
    $region14: #{_aug_odenet_pallas.1} parent=1 // pred_check
      _
    $region15: #{_aug_odenet_pallas.1} parent=1 // pred_check_branch
      %39 = sbr.rel (0) target = $region17
    $region16: #{_aug_odenet_pallas.1} parent=1 // pred_region
      %41 = dma.done [#allocation4], 128
    $region17: #{_aug_odenet_pallas.1} parent=1 // pred_fallthru
      _
    // Predicated region
    $region18: #{_aug_odenet_pallas.1} parent=1 // pred_check
      _
    $region19: #{_aug_odenet_pallas.1} parent=1 // pred_check_branch
      %43 = sbr.rel (0) target = $region21
    $region20: #{_aug_odenet_pallas.1} parent=1 // pred_region
      %45 = dma.done [#allocation7], 2560
    $region21: #{_aug_odenet_pallas.1} parent=1 // pred_fallthru
      _
    %s46 = sld [smem:[#allocation2]]
    %v47 = vld [vmem:[#allocation3] sm:$0xff]
    %v48 = vld [vmem:[#allocation6] sm:$0xff]
    %v49 = vld [vmem:[#allocation6 + $0x8] sm:$0x3]
    %v50 = vld [vmem:[#allocation6 + $0xa] sm:$0x3]
    %v51 = vstv %s46
    %v52 = vmul.f32 %v51, %v50
    %v54 = vrot.slane %v50, 1
    %v56 = vadd.f32 %v52, %v54
    %v57 = vperm.slane %v56, 0
    %vm58 = vcmask 80896
    %v60 = vsel %vm58, %v47, 0
    %vm62 = vcmask 1041408
    %v64 = vsel %vm62, %v49, 0
    %66 = vmatpush.msra.mxu0 0.0
    %67 = vmatpush.msra.mxu0 0.0
    %68 = vmatpush.msra.mxu0 0.0
    %69 = vmatpush.msra.mxu0 0.0
    %70 = vmatpush.msra.mxu0 0.0
    %71 = vmatpush.msra.mxu0 0.0
    %72 = vmatpush.msra.mxu0 0.0
    %73 = vmatpush.msra.mxu0 0.0
    %74 = vmatpush.msra.mxu0 0.0
    %75 = vmatpush.msra.mxu0 0.0
    %76 = vmatpush.msra.mxu0 0.0
    %77 = vmatpush.msra.mxu0 0.0
    %78 = vmatpush.msra.mxu0 0.0
    %79 = vmatpush.msra.mxu0 0.0
    %80 = vmatpush.msra.mxu0 %v64
    %81 = vmatpush.msra.mxu0 %v48
    %82 = vmatmul.f32.gmra.mxu0 %v60
    %v83 = vpop.f32.mrf.mxu0
    %v84 = vadd.f32 %v57, %v83
    %85 = vdwg.mxu0
    %vm86 = vcmp.gt.f32.partialorder %v84, 20.0
    %v87 = vmul.f32 %v84, 1.442695
    %v88 = vpow.pop %v87
    %v89 = vadd.f32 %v88, 1.0
    %v90 = vlog2.pop %v89
    %v91 = vmul.f32 %v90, 0.6931472
    %v92 = vmul.f32 -0.5, %v88
    %v93 = vadd.f32 %v92, 1.0
    %v94 = vmul.f32 %v93, %v88
    %v95 = vand.u32 2147483647, %v88
    %vm96 = vcmp.lt.f32.partialorder %v95, 0.0004427343
    %v97 = vsel %vm96, %v94, %v91
    %v98 = vsel %vm86, %v84, %v97
    %v99 = vld [vmem:[#allocation6 + $0x10] sm:$0xff]
    %v100 = vld [vmem:[#allocation6 + $0x18] sm:$0xff]
    %v101 = vld [vmem:[#allocation6 + $0x20] sm:$0xff]
    %v102 = vld [vmem:[#allocation6 + $0x28] sm:$0xff]
    %v103 = vld [vmem:[#allocation6 + $0x30] sm:$0xff]
    %v104 = vld [vmem:[#allocation6 + $0x38] sm:$0xff]
    %v105 = vld [vmem:[#allocation6 + $0x40] sm:$0xff]
    %v106 = vld [vmem:[#allocation6 + $0x48] sm:$0xff]
    %v107 = vld [vmem:[#allocation6 + $0x50] sm:$0x3]
    %v108 = vmul.f32 %v51, %v107
    %v110 = vrot.slane %v107, 1
    %v112 = vadd.f32 %v108, %v110
    %v113 = vperm.slane %v112, 0
    %vm114 = vcmask 523264
    %v116 = vsel %vm114, %v98, 0
    %118 = vmatpush.msra.mxu0 0.0
    %119 = vmatpush.msra.mxu0 0.0
    %120 = vmatpush.msra.mxu0 0.0
    %121 = vmatpush.msra.mxu0 0.0
    %122 = vmatpush.msra.mxu0 0.0
    %123 = vmatpush.msra.mxu0 0.0
    %124 = vmatpush.msra.mxu0 0.0
    %125 = vmatpush.msra.mxu0 0.0
    %126 = vmatpush.msra.mxu0 %v106
    %127 = vmatpush.msra.mxu0 %v105
    %128 = vmatpush.msra.mxu0 %v104
    %129 = vmatpush.msra.mxu0 %v103
    %130 = vmatpush.msra.mxu0 %v102
    %131 = vmatpush.msra.mxu0 %v101
    %132 = vmatpush.msra.mxu0 %v100
    %133 = vmatpush.msra.mxu0 %v99
    %134 = vmatmul.f32.gmra.mxu0 %v116
    %v135 = vpop.f32.mrf.mxu0
    %v136 = vadd.f32 %v113, %v135
    %137 = vdwg.mxu0
    %vm138 = vcmp.gt.f32.partialorder %v136, 20.0
    %v139 = vmul.f32 %v136, 1.442695
    %v140 = vpow.pop %v139
    %v141 = vadd.f32 %v140, 1.0
    %v142 = vlog2.pop %v141
    %v143 = vmul.f32 %v142, 0.6931472
    %v144 = vmul.f32 -0.5, %v140
    %v145 = vadd.f32 %v144, 1.0
    %v146 = vmul.f32 %v145, %v140
    %v147 = vand.u32 2147483647, %v140
    %vm148 = vcmp.lt.f32.partialorder %v147, 0.0004427343
    %v149 = vsel %vm148, %v146, %v143
    %v150 = vsel %vm138, %v136, %v149
    %v151 = vld [vmem:[#allocation6 + $0x58] sm:$0xff]
    %v152 = vld [vmem:[#allocation6 + $0x60] sm:$0xff]
    %v153 = vld [vmem:[#allocation6 + $0x68] sm:$0xff]
    %v154 = vld [vmem:[#allocation6 + $0x70] sm:$0xff]
    %v155 = vld [vmem:[#allocation6 + $0x78] sm:$0xff]
    %v156 = vld [vmem:[#allocation6 + $0x80] sm:$0xff]
    %v157 = vld [vmem:[#allocation6 + $0x88] sm:$0xff]
    %v158 = vld [vmem:[#allocation6 + $0x90] sm:$0xff]
    %v159 = vld [vmem:[#allocation6 + $0x98] sm:$0x3]
    %v160 = vmul.f32 %v51, %v159
    %v162 = vrot.slane %v159, 1
    %v164 = vadd.f32 %v160, %v162
    %v165 = vperm.slane %v164, 0
    %v167 = vsel %vm114, %v150, 0
    %169 = vmatpush.msra.mxu0 0.0
    %170 = vmatpush.msra.mxu0 0.0
    %171 = vmatpush.msra.mxu0 0.0
    %172 = vmatpush.msra.mxu0 0.0
    %173 = vmatpush.msra.mxu0 0.0
    %174 = vmatpush.msra.mxu0 0.0
    %175 = vmatpush.msra.mxu0 0.0
    %176 = vmatpush.msra.mxu0 0.0
    %177 = vmatpush.msra.mxu0 %v158
    %178 = vmatpush.msra.mxu0 %v157
    %179 = vmatpush.msra.mxu0 %v156
    %180 = vmatpush.msra.mxu0 %v155
    %181 = vmatpush.msra.mxu0 %v154
    %182 = vmatpush.msra.mxu0 %v153
    %183 = vmatpush.msra.mxu0 %v152
    %184 = vmatpush.msra.mxu0 %v151
    %185 = vmatmul.f32.gmra.mxu0 %v167
    %v186 = vpop.f32.mrf.mxu0
    %v187 = vadd.f32 %v165, %v186
    %188 = vdwg.mxu0
    %vm189 = vcmp.gt.f32.partialorder %v187, 20.0
    %v190 = vmul.f32 %v187, 1.442695
    %v191 = vpow.pop %v190
    %v192 = vadd.f32 %v191, 1.0
    %v193 = vlog2.pop %v192
    %v194 = vmul.f32 %v193, 0.6931472
    %v195 = vmul.f32 -0.5, %v191
    %v196 = vadd.f32 %v195, 1.0
    %v197 = vmul.f32 %v196, %v191
    %v198 = vand.u32 2147483647, %v191
    %vm199 = vcmp.lt.f32.partialorder %v198, 0.0004427343
    %v200 = vsel %vm199, %v197, %v194
    %v201 = vsel %vm189, %v187, %v200
    %202 = vst.msk [vmem:[#allocation8] sm:$0xff] %vm58, %v201
    // Predicated region
    $region22: #{_aug_odenet_pallas.1} parent=1 // pred_check
      _
    $region23: #{_aug_odenet_pallas.1} parent=1 // pred_check_branch
      %204 = sbr.rel (0) target = $region25
    $region24: #{_aug_odenet_pallas.1} parent=1 // pred_region
      %206 = vsyncadd [#allocation5], 0
      %s208 = sshll.u32 [#allocation8], 4
      %s209 = int_to_ptr.vmem [resolvable:$true] %s208
      %s210 = sshll.u32 %s3, 4
      %s211 = int_to_ptr.hbm [resolvable:$true] %s210
      %213 = dma.vmem_to_hbm [thread:$0]  %s209, 128, %s211, [#allocation5]
    $region25: #{_aug_odenet_pallas.1} parent=1 // pred_fallthru
      _
    // Predicated region
    $region26: #{_aug_odenet_pallas.1} parent=1 // pred_check
      _
    $region27: #{_aug_odenet_pallas.1} parent=1 // pred_check_branch
      %215 = sbr.rel (0) target = $region29
    $region28: #{_aug_odenet_pallas.1} parent=1 // pred_region
      %217 = dma.done [#allocation5], 128
    $region29: #{_aug_odenet_pallas.1} parent=1 // pred_fallthru
      _
    %218 = vsyncpa [#allocation4], 1
    %219 = vsyncpa [#allocation7], 1
    %220 = vsyncpa [#allocation5], 1

</llo_original>
